<compile_context>
chip_gen: v5e
topology: v5e:2x2
jax: 0.10.0
libtpu: 0.0.40
codegen_flags: <defaults>
</compile_context>

<pallas_src>
import functools

import jax
import jax.numpy as jnp
from jax.experimental import pallas as pl
from jax.experimental.pallas import tpu as pltpu


def _hardswish(x):
    # PyTorch Hardswish: x * relu6(x + 3) / 6
    return x * jnp.clip(x + 3.0, 0.0, 6.0) * (1.0 / 6.0)


# Tap order matches PyTorch conv weight layout: t = (di+1)*3 + (dj+1)
_TAPS = tuple((di, dj) for di in (-1, 0, 1) for dj in (-1, 0, 1))


@functools.lru_cache()
def _roll_shift_sign():
    """Probe pltpu.roll's shift convention once (tiny kernel) so the depthwise
    shifts are correct regardless of roll direction semantics."""
    def k(x_ref, o_ref):
        o_ref[...] = pltpu.roll(x_ref[...], 1, axis=1)

    x = jnp.broadcast_to(jnp.arange(128, dtype=jnp.float32)[None, :], (8, 128))
    y = pl.pallas_call(k, out_shape=jax.ShapeDtypeStruct((8, 128), jnp.float32))(x)
    # np.roll convention: y[0,0] == 127 (use shift = -s); opposite: y[0,0] == 1 (shift = +s)
    return -1 if float(y[0, 0]) > 64.0 else 1


# ----------------------------------- kernel -----------------------------------

def _fused_kernel(x_ref, masks_ref, slab_ref, o_ref, *, n_blocks, N, C, W, roll_sign):
    NC, HW = x_ref.shape
    P = 13 + N * C                       # slab rows per block

    x = x_ref[...]                       # (N*C, H*W) f32, row r = (batch r//C, channel r%C)
    masks = masks_ref[...]               # (9, H*W)   f32 {0,1} halo masks

    for blk in range(n_blocks):
        base = blk * P
        resid = x

        # ---- depthwise 3x3 conv: 9 masked lane shifts + per-row (=per-channel) weights
        acc = jnp.zeros((NC, HW), jnp.float32)
        for t, (di, dj) in enumerate(_TAPS):
            s = di * W + dj                                   # flat spatial shift
            if s == 0:
                shifted = x
            else:
                shifted = pltpu.roll(x, (roll_sign * s) % HW, axis=1)
            w_t = slab_ref[base + t]                          # (N*C, 1)
            m_t = masks[t:t + 1, :]                           # (1, H*W)
            acc = acc + shifted * w_t * m_t

        # ---- BN1 (folded scale/bias) + Hardswish
        y = _hardswish(acc * slab_ref[base + 9] + slab_ref[base + 10])

        # ---- 1x1 conv as VPU broadcast-MACs (no MXU):
        #      out row n*C+co = sum_ci wpw[ci, co] * y[n*C+ci]
        z = jnp.zeros((NC, HW), jnp.float32)
        k = base + 11
        for n in range(N):
            for ci in range(C):
                # (1, HW) * (N*C, 1) broadcasts to (N*C, HW); the coefficient row holds
                # wpw[ci, r % C] on rows of batch n and 0 elsewhere.
                z = z + y[n * C + ci:n * C + ci + 1, :] * slab_ref[k]
                k += 1

        # ---- BN2 (folded) + Hardswish
        z = _hardswish(z * slab_ref[base + 11 + N * C] + slab_ref[base + 12 + N * C])

        # TODO(synk): Dropout2d is identity in eval mode; training-mode per-channel
        #             dropout (with 1/(1-p) rescale) is not implemented here.
        x = z + resid

    o_ref[...] = x


# ---------------------------------- wrappers -----------------------------------

def _build_masks(H, W):
    """(9, H*W) boundary masks (1 where the shifted tap stays inside the image)."""
    pos = jnp.arange(H * W)
    row, col = pos // W, pos % W
    ms = []
    for di, dj in _TAPS:
        ok = (row + di >= 0) & (row + di < H) & (col + dj >= 0) & (col + dj < W)
        ms.append(ok.astype(jnp.float32))
    return jnp.stack(ms, axis=0)


def _pack_params(params_list, N, C):
    """Pack all per-block params into one (n_blocks*(13+N*C), N*C, 1) slab."""
    NC = N * C
    group = jnp.arange(NC) // C
    rows = []
    for (wdw, s1, b1, wpw, s2, b2) in params_list:
        for t in range(9):
            rows.append(jnp.tile(wdw[t], N))               # depthwise tap t
        rows.append(jnp.tile(s1, N))                       # BN1 scale
        rows.append(jnp.tile(b1, N))                       # BN1 bias
        for n in range(N):
            sel = (group == n).astype(jnp.float32)
            for ci in range(C):
                rows.append(jnp.tile(wpw[ci], N) * sel)    # pointwise coeff row (n, ci)
        rows.append(jnp.tile(s2, N))                       # BN2 scale
        rows.append(jnp.tile(b2, N))                       # BN2 bias
    slab = jnp.stack(rows, axis=0).astype(jnp.float32)     # (n_blocks*P, NC)
    return slab[:, :, None]                                # (n_blocks*P, NC, 1)


def res_bn_hs_dr_blocks_pallas(x_nchw, params_list):
    """ResBnHsDrBlocks forward (inference). x_nchw: (N, C, H, W) float32."""
    N, C, H, W = x_nchw.shape
    NC, HW = N * C, H * W
    n_blocks = len(params_list)

    x2 = x_nchw.reshape(NC, HW)                            # free reshape, no transpose
    masks = _build_masks(H, W)
    slab = _pack_params(params_list, N, C)

    kernel = functools.partial(_fused_kernel, n_blocks=n_blocks, N=N, C=C, W=W,
                               roll_sign=_roll_shift_sign())
    out2 = pl.pallas_call(
        kernel,
        out_shape=jax.ShapeDtypeStruct((NC, HW), jnp.float32),
        grid=(1,),
        in_specs=[
            pl.BlockSpec((NC, HW), lambda i: (0, 0)),
            pl.BlockSpec((9, HW), lambda i: (0, 0)),
            pl.BlockSpec(tuple(slab.shape), lambda i: (0, 0, 0)),
        ],
        out_specs=pl.BlockSpec((NC, HW), lambda i: (0, 0)),
        compiler_params=pltpu.CompilerParams(dimension_semantics=("arbitrary",)),
    )(x2, masks, slab)
    return out2.reshape(N, C, H, W)


# --------------------------- parameter construction ---------------------------

def make_block_params(key, C, eps=1e-5):
    """Deterministic synthetic parameters for one block (BN folded for eval)."""
    ks = jax.random.split(key, 8)
    # Depthwise conv weight, PyTorch (C, 1, 3, 3) -> (9, C) taps-major.
    w_dw = jax.random.normal(ks[0], (C, 3, 3), jnp.float32) * 0.2
    wdw = jnp.transpose(w_dw.reshape(C, 9), (1, 0))
    # BN1 params + running stats (folded).
    g1 = 1.0 + 0.1 * jax.random.normal(ks[1], (C,), jnp.float32)
    be1 = 0.1 * jax.random.normal(ks[2], (C,), jnp.float32)
    rm1 = 0.1 * jax.random.normal(ks[3], (C,), jnp.float32)
    rv1 = 1.0 + 0.1 * jax.random.uniform(ks[4], (C,), jnp.float32)
    s1 = g1 / jnp.sqrt(rv1 + eps)
    b1 = be1 - rm1 * s1
    # Pointwise conv weight, PyTorch (C_out, C_in, 1, 1) -> (C_in, C_out) = [ci, co].
    w_pw = jax.random.normal(ks[5], (C, C), jnp.float32) * 0.2
    wpw = jnp.transpose(w_pw, (1, 0))
    # BN2 params + running stats (folded).
    g2 = 1.0 + 0.1 * jax.random.normal(ks[6], (C,), jnp.float32)
    be2 = 0.1 * jax.random.normal(ks[7], (C,), jnp.float32)
    rm2 = jnp.zeros((C,), jnp.float32)
    rv2 = jnp.ones((C,), jnp.float32)
    s2 = g2 / jnp.sqrt(rv2 + eps)
    b2 = be2 - rm2 * s2
    return (wdw, s1, b1, wpw, s2, b2)


# ------------------------------ pure-JAX reference -----------------------------

def _ref_block(x, bp):
    wdw, s1, b1, wpw, s2, b2 = bp
    N, C, H, W = x.shape
    w = jnp.transpose(wdw, (1, 0)).reshape(C, 1, 3, 3)     # OIHW depthwise weight
    y = jax.lax.conv_general_dilated(
        x, w, window_strides=(1, 1), padding=((1, 1), (1, 1)),
        dimension_numbers=("NCHW", "OIHW", "NCHW"), feature_group_count=C,
        precision=jax.lax.Precision.HIGHEST)
    y = _hardswish(y * s1[None, :, None, None] + b1[None, :, None, None])
    y = jnp.einsum("nchw,cd->ndhw", y, wpw, precision=jax.lax.Precision.HIGHEST)
    y = _hardswish(y * s2[None, :, None, None] + b2[None, :, None, None])
    return y + x


def ref_blocks(x, params_list):
    for bp in params_list:
        x = _ref_block(x, bp)
    return x


# ------------------------------------ main -------------------------------------

if __name__ == "__main__":
    key = jax.random.PRNGKey(0)
    N, C, H, W = 2, 4, 16, 16          # module input is NCHW: (2, 4, 16, 16)
    n_blocks = 2                        # ResBnHsDrBlocks(c=4, d=0.1, n=2)

    k_x, k_p = jax.random.split(key)
    x = jax.random.normal(k_x, (N, C, H, W), jnp.float32)
    pkeys = jax.random.split(k_p, n_blocks)
    params_list = [make_block_params(pkeys[i], C) for i in range(n_blocks)]

    out = jax.block_until_ready(res_bn_hs_dr_blocks_pallas(x, params_list))

    ref = jax.block_until_ready(ref_blocks(x, params_list))
    assert out.shape == (N, C, H, W)
    assert jnp.allclose(out, ref, atol=1e-4, rtol=1e-4), "mismatch vs reference"

    print("KERNEL_OK")
</pallas_src>

<mosaic_0001>
module attributes {stable_mosaic.version = 11 : i64} {
  func.func @k(%arg0: memref<8x128xf32, #tpu.memory_space<vmem>>, %arg1: memref<8x128xf32, #tpu.memory_space<vmem>>) attributes {dimension_semantics = [], scalar_prefetch = 0 : i64, scratch_operands = 0 : i64, tpu.core_type = #tpu.core_type<tc>} {
    %c0 = arith.constant 0 : index
    %c0_0 = arith.constant 0 : index
    %0 = vector.load %arg0[%c0, %c0_0] : memref<8x128xf32, #tpu.memory_space<vmem>>, vector<8x128xf32>
    %c1_i32 = arith.constant 1 : i32
    %1 = tpu.dynamic_rotate %0 by %c1_i32 dim 1 : vector<8x128xf32>, i32 -> vector<8x128xf32>
    %c0_1 = arith.constant 0 : index
    %c0_2 = arith.constant 0 : index
    %2 = vector.load %arg1[%c0_1, %c0_2] : memref<8x128xf32, #tpu.memory_space<vmem>>, vector<8x128xf32>
    tpu.vector_store %arg1[%c0_1, %c0_2], %1 {strides = array<i32>} : memref<8x128xf32, #tpu.memory_space<vmem>>, vector<8x128xf32>,
    return
  }
}

</mosaic_0001>

<llo_original>
// kernel: tpu_custom_call.1
$region0: #{tpu_custom_call.1}
  #allocation0 [shape = 'u32[]', space=smem, size = 0x4, offset = 0x4, fixed_abs, tag = 'smem constant byte address 0x4 - core index']
  #allocation1 [shape = 'u32[72,128]{1,0:T(1,128)}', space=vmem, size = 0x9000, scoped, tag = 'internal scratch']
  %s0 = inlined_call_operand.hbm [shape: f32[8,128], index: 0, kind: input, shape index: {}]
  %s1 = inlined_call_operand.hbm [shape: f32[8,128], index: 1, kind: output, shape index: {}]
  %s2 = sld [smem:[#allocation0]]
  $region18: #{tpu_custom_call.1} parent=0
    _
  %s4 = ssub.s32 1, %s2
  %s5 = scalar_select 0, %s4, %s2
  $region1: #{tpu_custom_call.1} parent=0
    #allocation2 [shape = 'u8[4096]{0}', space=vmem, size = 0x1000, scoped, tag = 'input window, operand 0, single buffered']
    #allocation3 [shape = 's32[1]{0}', space=sflag, size = 0x4, scoped, tag = 'scoped memory for tpu_custom_call.1']
    #allocation4 [shape = 's32[1]{0}', space=sflag, size = 0x4, scoped, tag = 'scoped memory for tpu_custom_call.1']
    #allocation5 [shape = 'u8[4096]{0}', space=vmem, size = 0x1000, scoped, tag = 'output window, operand 0, single buffered']
    %6 = vsyncpa [#allocation3], 0
    %7 = vsyncpa [#allocation4], 0
    // Predicated region
    $region2: #{tpu_custom_call.1} parent=1 // pred_check
      _
    $region3: #{tpu_custom_call.1} parent=1 // pred_check_branch
      %9 = sbr.rel (0) target = $region5
    $region4: #{tpu_custom_call.1} parent=1 // pred_region
      %11 = vsyncadd [#allocation3], 0
      %s13 = sshll.u32 %s0, 4
      %s14 = int_to_ptr.hbm [resolvable:$true] %s13
      %s15 = sshll.u32 [#allocation2], 4
      %s16 = int_to_ptr.vmem [resolvable:$true] %s15
      %18 = dma.hbm_to_vmem [thread:$0]  %s14, 128, %s16, [#allocation3]
    $region5: #{tpu_custom_call.1} parent=1 // pred_fallthru
      _
    // Predicated region
    $region6: #{tpu_custom_call.1} parent=1 // pred_check
      _
    $region7: #{tpu_custom_call.1} parent=1 // pred_check_branch
      %20 = sbr.rel (0) target = $region9
    $region8: #{tpu_custom_call.1} parent=1 // pred_region
      %22 = dma.done [#allocation3], 128
    $region9: #{tpu_custom_call.1} parent=1 // pred_fallthru
      _
    %v23 = vld [vmem:[#allocation2] sm:$0xff]
    %24 = vrot.lane.b32.xlu0 %v23, 1
    %v25 = vpop.permute.xlu0 %24
    %26 = vst [vmem:[#allocation5] sm:$0xff] %v25
    // Predicated region
    $region10: #{tpu_custom_call.1} parent=1 // pred_check
      _
    $region11: #{tpu_custom_call.1} parent=1 // pred_check_branch
      %28 = sbr.rel (0) target = $region13
    $region12: #{tpu_custom_call.1} parent=1 // pred_region
      %30 = vsyncadd [#allocation4], 0
      %s32 = sshll.u32 [#allocation5], 4
      %s33 = int_to_ptr.vmem [resolvable:$true] %s32
      %s34 = sshll.u32 %s1, 4
      %s35 = int_to_ptr.hbm [resolvable:$true] %s34
      %37 = dma.vmem_to_hbm [thread:$0]  %s33, 128, %s35, [#allocation4]
    $region13: #{tpu_custom_call.1} parent=1 // pred_fallthru
      _
    // Predicated region
    $region14: #{tpu_custom_call.1} parent=1 // pred_check
      _
    $region15: #{tpu_custom_call.1} parent=1 // pred_check_branch
      %39 = sbr.rel (0) target = $region17
    $region16: #{tpu_custom_call.1} parent=1 // pred_region
      %41 = dma.done [#allocation4], 128
    $region17: #{tpu_custom_call.1} parent=1 // pred_fallthru
      _
    %42 = vsyncpa [#allocation3], 1
    %43 = vsyncpa [#allocation4], 1

</llo_original>
